<compile_context>
chip_gen: v6e
topology: v6e:2x2x1
jax: 0.10.0
libtpu: 0.0.40
codegen_flags: <defaults>
</compile_context>

<pallas_src>
import functools
from typing import NamedTuple, Optional

import jax
import jax.numpy as jnp
from jax import lax
from jax.experimental import pallas as pl
from jax.experimental.pallas import tpu as pltpu

EPS = 1e-5  # nn.BatchNorm1d default eps


def _round_up(x, m):
    return ((x + m - 1) // m) * m


class Plan(NamedTuple):
    batch: int
    in_f: int
    out_f: int
    in_p: int
    out_p: int
    tn: int
    tk: int
    single_k: bool     # no K grid axis: one dot over the full (padded) In
    x_resident: bool   # K grid: x DMA'd once as (B, In_p), sliced in-kernel
    vmem_limit: int


def make_plan(batch, in_features, out_features, *, path: Optional[str] = None):
    """Pick tiles / padded dims / execution path. `path` forces a path for testing:
    one of None (auto), "single", "kgrid_resident", "kgrid_stream"."""
    in_p128 = _round_up(in_features, 128)
    out_p128 = _round_up(out_features, 128)

    # 256-wide tiles only when they add no padding and (for Out) leave >= 2 J tiles.
    tn = 256 if (out_p128 % 256 == 0 and out_p128 >= 512) else 128
    tk = 256 if (in_p128 % 256 == 0 and in_p128 >= 512) else 128
    in_p = _round_up(in_features, tk)
    out_p = _round_up(out_features, tn)

    bf16, f32 = 2, 4
    x_bytes = batch * in_p * bf16          # whole (padded) x in bf16
    w_strip_bytes = in_p * tn * bf16       # full-In weight strip (single-K path)

    if path is None:
        single_k = (x_bytes <= (4 << 20)) and (w_strip_bytes <= (4 << 20))
        x_resident = (not single_k) and (x_bytes <= (4 << 20))
    else:
        single_k = path == "single"
        x_resident = path == "kgrid_resident"

    # VMEM working set (double-buffered inputs/outputs) + headroom.
    if single_k:
        ws = 2 * x_bytes + 2 * w_strip_bytes
    else:
        ws = (2 * x_bytes if x_resident else 2 * batch * tk * bf16) + 2 * tk * tn * bf16
    ws += 2 * batch * tn * f32 + 4 * tn * f32
    vmem_limit = min(max(ws + (4 << 20), 16 << 20), 128 << 20)

    return Plan(batch, in_features, out_features, in_p, out_p, tn, tk,
                single_k, x_resident, vmem_limit)


def fcblock_prepare(w_t, gamma, beta, plan: Plan):
    """One-time parameter prep (hoisted out of the per-call path): cast the Linear weight
    to bf16 and zero-pad weight / gamma / beta to the tile grid. The Linear bias is not
    needed (training-mode BN cancels it)."""
    In, Out = w_t.shape
    assert (In, Out) == (plan.in_f, plan.out_f)
    w_p = jnp.pad(w_t.astype(jnp.bfloat16),
                  ((0, plan.in_p - In), (0, plan.out_p - Out)))
    g_p = jnp.pad(jnp.asarray(gamma, jnp.float32).reshape(1, Out),
                  ((0, 0), (0, plan.out_p - Out)))
    b_p = jnp.pad(jnp.asarray(beta, jnp.float32).reshape(1, Out),
                  ((0, 0), (0, plan.out_p - Out)))
    return w_p, g_p, b_p


def _bn_relu(y, gamma, beta):
    # Fused single-read BN stats: E[y], E[y^2]; var clamped >= 0 against cancellation.
    inv_b = 1.0 / y.shape[0]                                   # true batch size (B not padded)
    mean = jnp.sum(y, axis=0, keepdims=True) * inv_b           # (1, tn)
    var = jnp.maximum(jnp.sum(y * y, axis=0, keepdims=True) * inv_b - mean * mean, 0.0)
    scale = gamma * lax.rsqrt(var + EPS)                       # rsqrt -> EUP slot
    shift = beta - mean * scale                                # folded affine
    return jnp.maximum(y * scale + shift, 0.0)


def _fcblock_single_k_kernel(x_ref, w_ref, g_ref, b_ref, o_ref):
    # grid = (J,); x index_map is constant -> DMA'd once. No init/epilogue phases.
    y = jnp.dot(x_ref[...], w_ref[...], preferred_element_type=jnp.float32)
    o_ref[...] = _bn_relu(y, g_ref[...], b_ref[...])


def _fcblock_kgrid_kernel(x_ref, w_ref, g_ref, b_ref, o_ref, *, tk, x_resident):
    # grid = (J [parallel], K [arbitrary, reduction, last]).
    # Accumulate directly into the resident f32 output block (no acc scratch).
    k = pl.program_id(1)

    @pl.when(k == 0)
    def _():
        o_ref[...] = jnp.zeros_like(o_ref)

    if x_resident:
        start = pl.multiple_of(k * tk, 128)
        x_tile = x_ref[:, pl.ds(start, tk)]
    else:
        x_tile = x_ref[...]
    o_ref[...] += jnp.dot(x_tile, w_ref[...], preferred_element_type=jnp.float32)

    @pl.when(k == pl.num_programs(1) - 1)
    def _():
        o_ref[...] = _bn_relu(o_ref[...], g_ref[...], b_ref[...])


@functools.partial(jax.jit, static_argnames=("plan",))
def fcblock_forward(x, w_p, g_p, b_p, plan: Plan):
    """x: (B, In) f32; prepared params from fcblock_prepare. Returns (B, Out) f32."""
    B, In = x.shape
    assert B == plan.batch and In == plan.in_f

    x_p = x.astype(jnp.bfloat16)
    if plan.in_p != In:
        x_p = jnp.pad(x_p, ((0, 0), (0, plan.in_p - In)))

    cparams = pltpu.CompilerParams(
        dimension_semantics=("parallel",) if plan.single_k else ("parallel", "arbitrary"),
        vmem_limit_bytes=plan.vmem_limit,
    )

    if plan.single_k:
        out_p = pl.pallas_call(
            _fcblock_single_k_kernel,
            out_shape=jax.ShapeDtypeStruct((B, plan.out_p), jnp.float32),
            grid_spec=pltpu.PrefetchScalarGridSpec(
                num_scalar_prefetch=0,
                grid=(plan.out_p // plan.tn,),
                in_specs=[
                    pl.BlockSpec((B, plan.in_p), lambda j: (0, 0)),        # x (once)
                    pl.BlockSpec((plan.in_p, plan.tn), lambda j: (0, j)),  # W strip
                    pl.BlockSpec((1, plan.tn), lambda j: (0, j)),          # gamma
                    pl.BlockSpec((1, plan.tn), lambda j: (0, j)),          # beta
                ],
                out_specs=pl.BlockSpec((B, plan.tn), lambda j: (0, j)),
            ),
            compiler_params=cparams,
        )(x_p, w_p, g_p, b_p)
    else:
        if plan.x_resident:
            x_spec = pl.BlockSpec((B, plan.in_p), lambda j, k: (0, 0))     # resident
        else:
            x_spec = pl.BlockSpec((B, plan.tk), lambda j, k: (0, k))       # streamed
        kernel = functools.partial(_fcblock_kgrid_kernel,
                                   tk=plan.tk, x_resident=plan.x_resident)
        out_p = pl.pallas_call(
            kernel,
            out_shape=jax.ShapeDtypeStruct((B, plan.out_p), jnp.float32),
            grid_spec=pltpu.PrefetchScalarGridSpec(
                num_scalar_prefetch=0,
                grid=(plan.out_p // plan.tn, plan.in_p // plan.tk),
                in_specs=[
                    x_spec,
                    pl.BlockSpec((plan.tk, plan.tn), lambda j, k: (k, j)),  # weight tile
                    pl.BlockSpec((1, plan.tn), lambda j, k: (0, j)),        # gamma
                    pl.BlockSpec((1, plan.tn), lambda j, k: (0, j)),        # beta
                ],
                out_specs=pl.BlockSpec((B, plan.tn), lambda j, k: (0, j)),
            ),
            compiler_params=cparams,
        )(x_p, w_p, g_p, b_p)

    if plan.out_p != plan.out_f:
        out_p = out_p[:, :plan.out_f]
    return out_p


def init_params(key, in_features, out_features):
    kw, kb = jax.random.split(key)
    # kaiming_normal_(nonlinearity='relu', mode='fan_in'): std = sqrt(2 / fan_in)
    std = (2.0 / in_features) ** 0.5
    w = jax.random.normal(kw, (out_features, in_features), jnp.float32) * std
    # nn.Linear default bias init: U(-1/sqrt(fan_in), 1/sqrt(fan_in))
    bound = 1.0 / (in_features ** 0.5)
    b = jax.random.uniform(kb, (1, out_features), jnp.float32, -bound, bound)
    gamma = jnp.full((1, out_features), 0.5, jnp.float32)  # bn1.weight = 0.5
    beta = jnp.zeros((1, out_features), jnp.float32)       # bn1.bias = 0
    return w.T, b, gamma, beta  # weight pre-transposed to (In, Out)


def fcblock_ref(x, w_t, b, gamma, beta):
    # Full-precision reference of the PyTorch module (bias included; it cancels in BN).
    y = x @ w_t + b
    mu = jnp.mean(y, axis=0, keepdims=True)
    var = jnp.mean((y - mu) ** 2, axis=0, keepdims=True)
    return jnp.maximum(gamma * (y - mu) / jnp.sqrt(var + EPS) + beta, 0.0)


if __name__ == "__main__":
    key = jax.random.PRNGKey(0)

    # (batch, in_features, out_features, forced paths to also exercise)
    cases = [
        (8, 16, 32, (None,)),
        (16, 384, 320, (None, "kgrid_resident", "kgrid_stream")),
    ]
    for batch, in_features, out_features, paths in cases:
        key, kx, kp = jax.random.split(key, 3)
        x = jax.random.normal(kx, (batch, in_features), jnp.float32)
        w_t, b, gamma, beta = init_params(kp, in_features, out_features)
        ref = fcblock_ref(x, w_t, b, gamma, beta)

        for path in paths:
            plan = make_plan(batch, in_features, out_features, path=path)
            w_p, g_p, b_p = fcblock_prepare(w_t, gamma, beta, plan)
            out = fcblock_forward(x, w_p, g_p, b_p, plan)
            jax.block_until_ready(out)

            assert out.shape == ref.shape, (out.shape, ref.shape)
            # bf16 matmul inputs -> compare against the f32 reference with bf16 tolerance
            assert jnp.allclose(out, ref, atol=2e-2, rtol=2e-2), (
                f"mismatch vs reference for {(batch, in_features, out_features)} path={path}")

    print("KERNEL_OK")
</pallas_src>

<mosaic_0001>
module attributes {stable_mosaic.version = 11 : i64} {
  func.func @_fcblock_single_k_kernel(%arg0: i32, %arg1: memref<8x128xbf16, #tpu.memory_space<vmem>>, %arg2: memref<128x128xbf16, #tpu.memory_space<vmem>>, %arg3: memref<1x128xf32, #tpu.memory_space<vmem>>, %arg4: memref<1x128xf32, #tpu.memory_space<vmem>>, %arg5: memref<8x128xf32, #tpu.memory_space<vmem>>) attributes {dimension_semantics = [#tpu.dimension_semantics<parallel>], iteration_bounds = array<i64: 1>, scalar_prefetch = 0 : i64, scratch_operands = 0 : i64, tpu.core_type = #tpu.core_type<tc>, window_params = [{pipeline_mode = #tpu.pipeline_mode<synchronous>, transform_indices = @transform_0, window_bounds = array<i64: 8, 128>}, {transform_indices = @transform_1, window_bounds = array<i64: 128, 128>}, {transform_indices = @transform_2, window_bounds = array<i64: 1, 128>}, {transform_indices = @transform_3, window_bounds = array<i64: 1, 128>}, {transform_indices = @transform_4, window_bounds = array<i64: 8, 128>}]} {
    %c0 = arith.constant 0 : index
    %c0_0 = arith.constant 0 : index
    %0 = vector.load %arg1[%c0, %c0_0] : memref<8x128xbf16, #tpu.memory_space<vmem>>, vector<8x128xbf16>
    %c0_1 = arith.constant 0 : index
    %c0_2 = arith.constant 0 : index
    %1 = vector.load %arg2[%c0_1, %c0_2] : memref<128x128xbf16, #tpu.memory_space<vmem>>, vector<128x128xbf16>
    %cst = arith.constant dense<0.000000e+00> : vector<8x128xf32>
    %2 = tpu.matmul %0, %1, %cst {dimension_numbers = #tpu.dot_dimension_numbers<[1], [0], [0], [1], [0, 0, 1, 1], [], []>} : vector<8x128xbf16>, vector<128x128xbf16>, vector<8x128xf32> -> vector<8x128xf32>
    %c0_3 = arith.constant 0 : index
    %c0_4 = arith.constant 0 : index
    %3 = vector.load %arg3[%c0_3, %c0_4] : memref<1x128xf32, #tpu.memory_space<vmem>>, vector<1x128xf32>
    %c0_5 = arith.constant 0 : index
    %c0_6 = arith.constant 0 : index
    %4 = vector.load %arg4[%c0_5, %c0_6] : memref<1x128xf32, #tpu.memory_space<vmem>>, vector<1x128xf32>
    %cst_7 = arith.constant dense<0.000000e+00> : vector<128xf32>
    %5 = vector.multi_reduction <add>, %2, %cst_7 [0] : vector<8x128xf32> to vector<128xf32>
    %6 = vector.shape_cast %5 : vector<128xf32> to vector<1x128xf32>
    %cst_8 = arith.constant 1.250000e-01 : f32
    %7 = vector.broadcast %cst_8 : f32 to vector<1x128xf32>
    %8 = arith.mulf %6, %7 : vector<1x128xf32>
    %9 = arith.mulf %2, %2 : vector<8x128xf32>
    %cst_9 = arith.constant dense<0.000000e+00> : vector<128xf32>
    %10 = vector.multi_reduction <add>, %9, %cst_9 [0] : vector<8x128xf32> to vector<128xf32>
    %11 = vector.shape_cast %10 : vector<128xf32> to vector<1x128xf32>
    %cst_10 = arith.constant 1.250000e-01 : f32
    %12 = vector.broadcast %cst_10 : f32 to vector<1x128xf32>
    %13 = arith.mulf %11, %12 : vector<1x128xf32>
    %14 = arith.mulf %8, %8 : vector<1x128xf32>
    %15 = arith.subf %13, %14 : vector<1x128xf32>
    %cst_11 = arith.constant 0.000000e+00 : f32
    %16 = vector.broadcast %cst_11 : f32 to vector<1x128xf32>
    %17 = arith.maximumf %15, %16 : vector<1x128xf32>
    %cst_12 = arith.constant 9.99999974E-6 : f32
    %18 = vector.broadcast %cst_12 : f32 to vector<1x128xf32>
    %19 = arith.addf %17, %18 : vector<1x128xf32>
    %20 = math.rsqrt %19 : vector<1x128xf32>
    %21 = arith.mulf %3, %20 : vector<1x128xf32>
    %22 = arith.mulf %8, %21 : vector<1x128xf32>
    %23 = arith.subf %4, %22 : vector<1x128xf32>
    %24 = vector.broadcast %21 : vector<1x128xf32> to vector<8x128xf32>
    %25 = arith.mulf %2, %24 : vector<8x128xf32>
    %26 = vector.broadcast %23 : vector<1x128xf32> to vector<8x128xf32>
    %27 = arith.addf %25, %26 : vector<8x128xf32>
    %cst_13 = arith.constant 0.000000e+00 : f32
    %28 = vector.broadcast %cst_13 : f32 to vector<8x128xf32>
    %29 = arith.maximumf %27, %28 : vector<8x128xf32>
    %c0_14 = arith.constant 0 : index
    %c0_15 = arith.constant 0 : index
    %30 = vector.load %arg5[%c0_14, %c0_15] : memref<8x128xf32, #tpu.memory_space<vmem>>, vector<8x128xf32>
    tpu.vector_store %arg5[%c0_14, %c0_15], %29 {strides = array<i32>} : memref<8x128xf32, #tpu.memory_space<vmem>>, vector<8x128xf32>,
    return
  }
  func.func @transform_0(%arg0: i32) -> (i32, i32) {
    %c0_i32 = arith.constant 0 : i32
    %c0_i32_0 = arith.constant 0 : i32
    %c0_i32_1 = arith.constant 0 : i32
    return %c0_i32, %c0_i32_0 : i32, i32
  }
  func.func @transform_1(%arg0: i32) -> (i32, i32) {
    %c0_i32 = arith.constant 0 : i32
    %c0_i32_0 = arith.constant 0 : i32
    return %c0_i32, %arg0 : i32, i32
  }
  func.func @transform_2(%arg0: i32) -> (i32, i32) {
    %c0_i32 = arith.constant 0 : i32
    %c0_i32_0 = arith.constant 0 : i32
    return %c0_i32, %arg0 : i32, i32
  }
  func.func @transform_3(%arg0: i32) -> (i32, i32) {
    %c0_i32 = arith.constant 0 : i32
    %c0_i32_0 = arith.constant 0 : i32
    return %c0_i32, %arg0 : i32, i32
  }
  func.func @transform_4(%arg0: i32) -> (i32, i32) {
    %c0_i32 = arith.constant 0 : i32
    %c0_i32_0 = arith.constant 0 : i32
    return %c0_i32, %arg0 : i32, i32
  }
}

</mosaic_0001>

<llo_original>
// kernel: fcblock_forward.1
$region0: #{fcblock_forward.1}
  #allocation0 [shape = 'u32[]', space=smem, size = 0x4, offset = 0x4, fixed_abs, tag = 'smem constant byte address 0x4 - core index']
  #allocation1 [shape = 'u32[144,128]{1,0:T(1,128)}', space=vmem, size = 0x12000, scoped, tag = 'internal scratch']
  %s0 = inlined_call_operand.vmem [shape: bf16[8,128], index: 0, kind: input, shape index: {}]
  %s1 = inlined_call_operand.hbm [shape: bf16[128,128], index: 1, kind: input, shape index: {}]
  %s2 = inlined_call_operand.vmem [shape: f32[1,128], index: 2, kind: input, shape index: {}]
  %s3 = inlined_call_operand.vmem [shape: f32[1,128], index: 3, kind: input, shape index: {}]
  %s4 = inlined_call_operand.hbm [shape: f32[8,128], index: 4, kind: output, shape index: {}]
  %s5 = sld [smem:[#allocation0]]
  $region30: #{fcblock_forward.1} parent=0
    _
  %s7 = ssub.s32 1, %s5
  %s8 = scalar_select 0, %s7, %s5
  $region1: #{fcblock_forward.1} parent=0
    #allocation2 [shape = 'u8[32768]{0}', space=vmem, size = 0x8000, scoped, tag = 'input window, operand 1, single buffered']
    #allocation3 [shape = 's32[1]{0}', space=sflag, size = 0x4, scoped, tag = 'scoped memory for fcblock_forward.1']
    #allocation4 [shape = 's32[1]{0}', space=sflag, size = 0x4, scoped, tag = 'scoped memory for fcblock_forward.1']
    #allocation5 [shape = 'u8[4096]{0}', space=vmem, size = 0x1000, scoped, tag = 'output window, operand 0, single buffered']
    %9 = vsyncpa [#allocation3], 0
    %10 = vsyncpa [#allocation4], 0
    // Predicated region
    $region2: #{fcblock_forward.1} parent=1 // pred_check
      _
    $region3: #{fcblock_forward.1} parent=1 // pred_check_branch
      %12 = sbr.rel (0) target = $region5
    $region4: #{fcblock_forward.1} parent=1 // pred_region
      _
    $region5: #{fcblock_forward.1} parent=1 // pred_fallthru
      _
    // Predicated region
    $region6: #{fcblock_forward.1} parent=1 // pred_check
      _
    $region7: #{fcblock_forward.1} parent=1 // pred_check_branch
      %14 = sbr.rel (0) target = $region9
    $region8: #{fcblock_forward.1} parent=1 // pred_region
      %s16 = ssub.s32 1024, 1024
      %17 = vsyncadd [#allocation3], %s16
      %s18 = sshll.u32 [#allocation2], 4
      %s19 = int_to_ptr.vmem [resolvable:$true] %s18
      %24 = dma.hbm_to_vmem [thread:$0]  %s1, 1024, %s19, [#allocation3], 64, 64, 4
    $region9: #{fcblock_forward.1} parent=1 // pred_fallthru
      _
    // Predicated region
    $region10: #{fcblock_forward.1} parent=1 // pred_check
      _
    $region11: #{fcblock_forward.1} parent=1 // pred_check_branch
      %26 = sbr.rel (0) target = $region13
    $region12: #{fcblock_forward.1} parent=1 // pred_region
      _
    $region13: #{fcblock_forward.1} parent=1 // pred_fallthru
      _
    // Predicated region
    $region14: #{fcblock_forward.1} parent=1 // pred_check
      _
    $region15: #{fcblock_forward.1} parent=1 // pred_check_branch
      %28 = sbr.rel (0) target = $region17
    $region16: #{fcblock_forward.1} parent=1 // pred_region
      _
    $region17: #{fcblock_forward.1} parent=1 // pred_fallthru
      _
    // Predicated region
    $region18: #{fcblock_forward.1} parent=1 // pred_check
      _
    $region19: #{fcblock_forward.1} parent=1 // pred_check_branch
      %30 = sbr.rel (0) target = $region21
    $region20: #{fcblock_forward.1} parent=1 // pred_region
      %31 = dma.done [#allocation3], 1024
    $region21: #{fcblock_forward.1} parent=1 // pred_fallthru
      _
    %v33 = vld [vmem:[%s0] sm:$0xf]
    %v34 = vld [vmem:[#allocation2] sm:$0xf]
    %v35 = vld [vmem:[#allocation2 + $0x4] sm:$0xf]
    %v36 = vld [vmem:[#allocation2 + $0x8] sm:$0xf]
    %v37 = vld [vmem:[#allocation2 + $0xc] sm:$0xf]
    %v38 = vld [vmem:[#allocation2 + $0x10] sm:$0xf]
    %v39 = vld [vmem:[#allocation2 + $0x14] sm:$0xf]
    %v40 = vld [vmem:[#allocation2 + $0x18] sm:$0xf]
    %v41 = vld [vmem:[#allocation2 + $0x1c] sm:$0xf]
    %v42 = vld [vmem:[#allocation2 + $0x20] sm:$0xf]
    %v43 = vld [vmem:[#allocation2 + $0x24] sm:$0xf]
    %v44 = vld [vmem:[#allocation2 + $0x28] sm:$0xf]
    %v45 = vld [vmem:[#allocation2 + $0x2c] sm:$0xf]
    %v46 = vld [vmem:[#allocation2 + $0x30] sm:$0xf]
    %v47 = vld [vmem:[#allocation2 + $0x34] sm:$0xf]
    %v48 = vld [vmem:[#allocation2 + $0x38] sm:$0xf]
    %v49 = vld [vmem:[#allocation2 + $0x3c] sm:$0xf]
    %v66 = vunpack.c.l.b16 %v34
    %v67 = vunpack.c.l.b16 %v35
    %v68 = vunpack.c.l.b16 %v36
    %v69 = vunpack.c.l.b16 %v37
    %v70 = vunpack.c.l.b16 %v38
    %v71 = vunpack.c.l.b16 %v39
    %v72 = vunpack.c.l.b16 %v40
    %v73 = vunpack.c.l.b16 %v41
    %v74 = vunpack.c.l.b16 %v42
    %v75 = vunpack.c.l.b16 %v43
    %v76 = vunpack.c.l.b16 %v44
    %v77 = vunpack.c.l.b16 %v45
    %v78 = vunpack.c.l.b16 %v46
    %v79 = vunpack.c.l.b16 %v47
    %v80 = vunpack.c.l.b16 %v48
    %v81 = vunpack.c.l.b16 %v49
    %v82 = vpack.c.b16 %v67, %v66
    %v83 = vpack.c.b16 %v69, %v68
    %v84 = vpack.c.b16 %v71, %v70
    %v85 = vpack.c.b16 %v73, %v72
    %v86 = vpack.c.b16 %v75, %v74
    %v87 = vpack.c.b16 %v77, %v76
    %v88 = vpack.c.b16 %v79, %v78
    %v89 = vpack.c.b16 %v81, %v80
    %98 = vmatprep.subr.bf16.mxu0 0
    %99 = vmatpush1.bf16.msra.mxu0 %v89
    %100 = vmatprep.subr.bf16.mxu0 0
    %101 = vmatpush1.bf16.msra.mxu0 %v88
    %102 = vmatprep.subr.bf16.mxu0 0
    %103 = vmatpush1.bf16.msra.mxu0 %v87
    %104 = vmatprep.subr.bf16.mxu0 0
    %105 = vmatpush1.bf16.msra.mxu0 %v86
    %106 = vmatprep.subr.bf16.mxu0 0
    %107 = vmatpush1.bf16.msra.mxu0 %v85
    %108 = vmatprep.subr.bf16.mxu0 0
    %109 = vmatpush1.bf16.msra.mxu0 %v84
    %110 = vmatprep.subr.bf16.mxu0 0
    %111 = vmatpush1.bf16.msra.mxu0 %v83
    %112 = vmatprep.subr.bf16.mxu0 0
    %113 = vmatpush1.bf16.msra.mxu0 %v82
    %114 = vmatprep.subr.bf16.mxu0 0
    %115 = vmatpush2.bf16.msra.mxu0 0
    %116 = vmatprep.subr.bf16.mxu0 0
    %117 = vmatpush2.bf16.msra.mxu0 0
    %118 = vmatprep.subr.bf16.mxu0 0
    %119 = vmatpush2.bf16.msra.mxu0 0
    %120 = vmatprep.subr.bf16.mxu0 0
    %121 = vmatpush2.bf16.msra.mxu0 0
    %122 = vmatprep.subr.bf16.mxu0 0
    %123 = vmatpush2.bf16.msra.mxu0 0
    %124 = vmatprep.subr.bf16.mxu0 0
    %125 = vmatpush2.bf16.msra.mxu0 0
    %126 = vmatprep.subr.bf16.mxu0 0
    %127 = vmatpush2.bf16.msra.mxu0 0
    %128 = vmatprep.subr.bf16.mxu0 0
    %129 = vmatpush2.bf16.msra.mxu0 0
    %130 = vmatprep.mubr.bf16.mxu0 0
    %131 = vmatmul.mubr.bf16.gmra.mxu0 %v33
    %v132 = vpop.f32.mrf.mxu0
    %v133 = vadd.f32 0.0, %v132
    %v134 = vpop.f32.mrf.mxu0
    %v135 = vpop.f32.mrf.mxu0
    %v136 = vpop.f32.mrf.mxu0
    %137 = vdwg.mxu0
    %v138 = vld [vmem:[%s2] sm:$0x1]
    %v139 = vld [vmem:[%s3] sm:$0x1]
    %v140 = vrot.slane %v133, 4
    %v141 = vadd.f32 %v133, %v140
    %v142 = vrot.slane %v141, 2
    %v143 = vadd.f32 %v141, %v142
    %v144 = vrot.slane %v143, 1
    %v145 = vadd.f32 %v143, %v144
    %v146 = vmul.f32 %v145, 0.125
    %v147 = vmul.f32 %v133, %v133
    %v148 = vrot.slane %v147, 4
    %v149 = vadd.f32 %v147, %v148
    %v150 = vrot.slane %v149, 2
    %v151 = vadd.f32 %v149, %v150
    %v152 = vrot.slane %v151, 1
    %v153 = vadd.f32 %v151, %v152
    %v154 = vmul.f32 %v153, 0.125
    %v155 = vmul.f32 %v146, %v146
    %v156 = vsub.f32 %v154, %v155
    %v157 = vmax.f32 %v156, 0.0
    %v158 = vadd.f32 %v157, 1e-05
    %v159 = vrsqrt.pop %v158
    %v160 = vmul.f32 %v138, %v159
    %v161 = vmul.f32 %v146, %v160
    %v162 = vsub.f32 %v139, %v161
    %v164 = vlaneseq
    %v165 = vshrl.u32 %v164, 7
    %v166 = vsub.s32 0, %v165
    %v167 = vrot.slane %v160, %v166
    %v169 = vmul.f32 %v133, %v167
    %v171 = vlaneseq
    %v172 = vshrl.u32 %v171, 7
    %v173 = vsub.s32 0, %v172
    %v174 = vrot.slane %v162, %v173
    %v176 = vadd.f32 %v169, %v174
    %v177 = vmax.f32 %v176, 0.0
    %178 = vst [vmem:[#allocation5] sm:$0xff] %v177
    // Predicated region
    $region22: #{fcblock_forward.1} parent=1 // pred_check
      _
    $region23: #{fcblock_forward.1} parent=1 // pred_check_branch
      %180 = sbr.rel (0) target = $region25
    $region24: #{fcblock_forward.1} parent=1 // pred_region
      %s182 = ssub.s32 128, 128
      %183 = vsyncadd [#allocation4], %s182
      %s185 = sshll.u32 [#allocation5], 4
      %s186 = int_to_ptr.vmem [resolvable:$true] %s185
      %188 = dma.vmem_to_hbm [thread:$0]  %s186, 128, %s4, [#allocation4]
    $region25: #{fcblock_forward.1} parent=1 // pred_fallthru
      _
    // Predicated region
    $region26: #{fcblock_forward.1} parent=1 // pred_check
      _
    $region27: #{fcblock_forward.1} parent=1 // pred_check_branch
      %190 = sbr.rel (0) target = $region29
    $region28: #{fcblock_forward.1} parent=1 // pred_region
      %191 = dma.done [#allocation4], 128
    $region29: #{fcblock_forward.1} parent=1 // pred_fallthru
      _
    %192 = vsyncpa [#allocation3], 1
    %193 = vsyncpa [#allocation4], 1

</llo_original>
